<compile_context>
chip_gen: v5e
topology: v5e:2x2
jax: 0.10.0
libtpu: 0.0.40
codegen_flags: <defaults>
</compile_context>

<pallas_src>
import jax
import jax.numpy as jnp
from jax.experimental import pallas as pl
from jax.experimental.pallas import tpu as pltpu

BATCH = 8
IN_FEATURES = 16
HIDDEN = 1          # hidden_size in the PyTorch spec
OUT_FEATURES = 1


def fused_mlp_kernel(scalars_ref, x_ref, w1_ref, o_ref):
    # scalars_ref : SMEM (3,)  = [b1, w2, b2]
    # x_ref       : VMEM (B, 16)
    # w1_ref      : VMEM (1, 16)   (linear1.weight row, hidden_size == 1)
    x = x_ref[...]                       # (B, 16) f32
    w1 = w1_ref[...]                     # (1, 16) f32

    b1 = scalars_ref[0]
    w2 = scalars_ref[1]
    b2 = scalars_ref[2]

    # Linear1: VPU multiply + XLU lane reduction (no MXU round-trip).
    l1 = jnp.sum(x * w1, axis=-1, keepdims=True) + b1      # (B, 1)
    # Linear2 (1 -> 1): plain scalar multiply-add.
    l2 = l1 * w2 + b2                                       # (B, 1)

    o_ref[...] = (jax.nn.sigmoid(l1) * jax.nn.sigmoid(l2)).astype(o_ref.dtype)


def fused_mlp(x, w1, b1, w2, b2):
    """x: (B, 16).  Params in PyTorch Linear layout:
       w1 (H, 16), b1 (H,), w2 (1, H), b2 (1,)."""
    B, K = x.shape
    H = w1.shape[0]
    assert H == 1 and w2.shape == (1, 1), "kernel specialized for hidden_size == 1"

    w1_row = w1.reshape(1, K).astype(jnp.float32)                              # (1, 16)
    scalars = jnp.concatenate(
        [b1.reshape(-1), w2.reshape(-1), b2.reshape(-1)]).astype(jnp.float32)  # (3,)

    return pl.pallas_call(
        fused_mlp_kernel,
        out_shape=jax.ShapeDtypeStruct((B, 1), x.dtype),
        grid=(),
        in_specs=[
            pl.BlockSpec(memory_space=pltpu.MemorySpace.SMEM),   # [b1, w2, b2]
            pl.BlockSpec(x.shape, lambda: (0, 0)),               # x, full block
            pl.BlockSpec((1, K), lambda: (0, 0)),                # w1 row, full block
        ],
        out_specs=pl.BlockSpec((B, 1), lambda: (0, 0)),
        cost_estimate=pl.CostEstimate(
            flops=2 * B * K + 3 * B,          # mul/add reduce + scalar FMA + final mul
            transcendentals=2 * B,            # two sigmoids per row
            bytes_accessed=(B * K + K + 3 + B) * 4,
        ),
    )(scalars, x, w1_row)


if __name__ == "__main__":
    key = jax.random.PRNGKey(0)
    kx, k1, k2, k3, k4 = jax.random.split(key, 5)

    x = jax.random.normal(kx, (BATCH, IN_FEATURES), dtype=jnp.float32)

    # Deterministic synthetic parameters in PyTorch Linear layout:
    #   linear1.weight (H, 16), linear1.bias (H,)
    #   linear2.weight (1, H),  linear2.bias (1,)
    w1 = jax.random.normal(k1, (HIDDEN, IN_FEATURES), dtype=jnp.float32) * 0.1
    b1 = jax.random.normal(k2, (HIDDEN,), dtype=jnp.float32) * 0.1
    w2 = jax.random.normal(k3, (OUT_FEATURES, HIDDEN), dtype=jnp.float32) * 0.1
    b2 = jax.random.normal(k4, (OUT_FEATURES,), dtype=jnp.float32) * 0.1

    out = fused_mlp(x, w1, b1, w2, b2)
    jax.block_until_ready(out)

    # Pure-JAX reference check (PyTorch semantics: x @ W.T + b)
    l1 = x @ w1.T + b1
    l2 = l1 @ w2.T + b2
    ref = jax.nn.sigmoid(l1) * jax.nn.sigmoid(l2)
    assert out.shape == (BATCH, 1)
    assert jnp.allclose(out, ref, atol=1e-5, rtol=1e-5)

    print("KERNEL_OK")
</pallas_src>

<mosaic_0001>
module attributes {stable_mosaic.version = 11 : i64} {
  func.func @fused_mlp_kernel(%arg0: memref<3xf32, #tpu.memory_space<smem>>, %arg1: memref<8x16xf32, #tpu.memory_space<vmem>>, %arg2: memref<1x16xf32, #tpu.memory_space<vmem>>, %arg3: memref<8x1xf32, #tpu.memory_space<vmem>>) attributes {dimension_semantics = [], scalar_prefetch = 0 : i64, scratch_operands = 0 : i64, tpu.core_type = #tpu.core_type<tc>} {
    %c0 = arith.constant 0 : index
    %c0_0 = arith.constant 0 : index
    %0 = vector.load %arg1[%c0, %c0_0] : memref<8x16xf32, #tpu.memory_space<vmem>>, vector<8x16xf32>
    %c0_1 = arith.constant 0 : index
    %c0_2 = arith.constant 0 : index
    %1 = vector.load %arg2[%c0_1, %c0_2] : memref<1x16xf32, #tpu.memory_space<vmem>>, vector<1x16xf32>
    %c0_3 = arith.constant 0 : index
    %2 = memref.load %arg0[%c0_3] : memref<3xf32, #tpu.memory_space<smem>>
    %c1 = arith.constant 1 : index
    %3 = memref.load %arg0[%c1] : memref<3xf32, #tpu.memory_space<smem>>
    %c2 = arith.constant 2 : index
    %4 = memref.load %arg0[%c2] : memref<3xf32, #tpu.memory_space<smem>>
    %5 = vector.broadcast %1 : vector<1x16xf32> to vector<8x16xf32>
    %6 = arith.mulf %0, %5 : vector<8x16xf32>
    %cst = arith.constant dense<0.000000e+00> : vector<8xf32>
    %7 = vector.multi_reduction <add>, %6, %cst [1] : vector<8x16xf32> to vector<8xf32>
    %8 = vector.shape_cast %7 : vector<8xf32> to vector<8x1xf32>
    %9 = vector.broadcast %2 : f32 to vector<8x1xf32>
    %10 = arith.addf %8, %9 : vector<8x1xf32>
    %11 = vector.broadcast %3 : f32 to vector<8x1xf32>
    %12 = arith.mulf %10, %11 : vector<8x1xf32>
    %13 = vector.broadcast %4 : f32 to vector<8x1xf32>
    %14 = arith.addf %12, %13 : vector<8x1xf32>
    %15 = arith.negf %10 : vector<8x1xf32>
    %16 = math.exp %15 : vector<8x1xf32>
    %cst_4 = arith.constant 1.000000e+00 : f32
    %17 = vector.broadcast %cst_4 : f32 to vector<8x1xf32>
    %18 = arith.addf %17, %16 : vector<8x1xf32>
    %19 = arith.divf %17, %18 : vector<8x1xf32>
    %20 = arith.negf %14 : vector<8x1xf32>
    %21 = math.exp %20 : vector<8x1xf32>
    %cst_5 = arith.constant 1.000000e+00 : f32
    %22 = vector.broadcast %cst_5 : f32 to vector<8x1xf32>
    %23 = arith.addf %22, %21 : vector<8x1xf32>
    %24 = arith.divf %22, %23 : vector<8x1xf32>
    %25 = arith.mulf %19, %24 : vector<8x1xf32>
    %c0_6 = arith.constant 0 : index
    %c0_7 = arith.constant 0 : index
    %26 = vector.load %arg3[%c0_6, %c0_7] : memref<8x1xf32, #tpu.memory_space<vmem>>, vector<8x1xf32>
    tpu.vector_store %arg3[%c0_6, %c0_7], %25 {strides = array<i32>} : memref<8x1xf32, #tpu.memory_space<vmem>>, vector<8x1xf32>,
    return
  }
}

</mosaic_0001>

<llo_original>
// kernel: tpu_custom_call.1
$region0: #{tpu_custom_call.1}
  #allocation0 [shape = 'u32[]', space=smem, size = 0x4, offset = 0x4, fixed_abs, tag = 'smem constant byte address 0x4 - core index']
  #allocation1 [shape = 'u32[72,128]{1,0:T(1,128)}', space=vmem, size = 0x9000, scoped, tag = 'internal scratch']
  %s0 = inlined_call_operand.hbm [shape: f32[3], index: 0, kind: input, shape index: {}]
  %s1 = inlined_call_operand.hbm [shape: f32[8,16], index: 1, kind: input, shape index: {}]
  %s2 = inlined_call_operand.vmem [shape: f32[1,16], index: 2, kind: input, shape index: {}]
  %s3 = inlined_call_operand.vmem [shape: f32[8,1], index: 3, kind: output, shape index: {}]
  %s4 = sld [smem:[#allocation0]]
  $region30: #{tpu_custom_call.1} parent=0
    _
  %s6 = ssub.s32 1, %s4
  %s7 = scalar_select 0, %s6, %s4
  $region1: #{tpu_custom_call.1} parent=0
    #allocation2 [shape = 'u8[512]{0}', space=smem, size = 0x200, scoped, tag = 'input window, operand 0, single buffered']
    #allocation3 [shape = 's32[1]{0}', space=sflag, size = 0x4, scoped, tag = 'scoped memory for tpu_custom_call.1']
    #allocation4 [shape = 's32[1]{0}', space=sflag, size = 0x4, scoped, tag = 'scoped memory for tpu_custom_call.1']
    #allocation5 [shape = 'u8[4096]{0}', space=vmem, size = 0x1000, scoped, tag = 'input window, operand 1, single buffered']
    %8 = vsyncpa [#allocation4], 0
    %9 = vsyncpa [#allocation3], 0
    // Predicated region
    $region2: #{tpu_custom_call.1} parent=1 // pred_check
      _
    $region3: #{tpu_custom_call.1} parent=1 // pred_check_branch
      %11 = sbr.rel (0) target = $region5
    $region4: #{tpu_custom_call.1} parent=1 // pred_region
      %13 = vsyncadd [#allocation4], 0
      %s15 = sshll.u32 %s0, 4
      %s16 = int_to_ptr.hbm [resolvable:$true] %s15
      %18 = dma.hbm_to_smem %s16, 16, [#allocation2], [#allocation4]
    $region5: #{tpu_custom_call.1} parent=1 // pred_fallthru
      _
    // Predicated region
    $region6: #{tpu_custom_call.1} parent=1 // pred_check
      _
    $region7: #{tpu_custom_call.1} parent=1 // pred_check_branch
      %20 = sbr.rel (0) target = $region9
    $region8: #{tpu_custom_call.1} parent=1 // pred_region
      %22 = vsyncadd [#allocation3], 0
      %s24 = sshll.u32 %s1, 4
      %s25 = int_to_ptr.hbm [resolvable:$true] %s24
      %s26 = sshll.u32 [#allocation5], 4
      %s27 = int_to_ptr.vmem [resolvable:$true] %s26
      %29 = dma.hbm_to_vmem [thread:$0]  %s25, 128, %s27, [#allocation3]
    $region9: #{tpu_custom_call.1} parent=1 // pred_fallthru
      _
    // Predicated region
    $region10: #{tpu_custom_call.1} parent=1 // pred_check
      _
    $region11: #{tpu_custom_call.1} parent=1 // pred_check_branch
      %31 = sbr.rel (0) target = $region13
    $region12: #{tpu_custom_call.1} parent=1 // pred_region
      _
    $region13: #{tpu_custom_call.1} parent=1 // pred_fallthru
      _
    // Predicated region
    $region14: #{tpu_custom_call.1} parent=1 // pred_check
      _
    $region15: #{tpu_custom_call.1} parent=1 // pred_check_branch
      %33 = sbr.rel (0) target = $region17
    $region16: #{tpu_custom_call.1} parent=1 // pred_region
      %35 = dma.done [#allocation4], 16
    $region17: #{tpu_custom_call.1} parent=1 // pred_fallthru
      _
    // Predicated region
    $region18: #{tpu_custom_call.1} parent=1 // pred_check
      _
    $region19: #{tpu_custom_call.1} parent=1 // pred_check_branch
      %37 = sbr.rel (0) target = $region21
    $region20: #{tpu_custom_call.1} parent=1 // pred_region
      %39 = dma.done [#allocation3], 128
    $region21: #{tpu_custom_call.1} parent=1 // pred_fallthru
      _
    %40 = sfence
    %v41 = vld [vmem:[#allocation5] sm:$0xff]
    %v42 = vld [vmem:[%s2] sm:$0x1]
    %s43 = sld [smem:[#allocation2]]
    %s44 = sld [smem:[#allocation2 + $0x1]]
    %s45 = sld [smem:[#allocation2 + $0x2]]
    %v47 = vperm.slane %v42, 0
    %v49 = vmul.f32 %v41, %v47
    %vm50 = vcmask 130048
    %v51 = vsel %vm50, %v49, 0.0
    %52 = vadd.xlane.f32.xlu0 %v51
    %v53 = vpop.xlane.xlu0 %52
    %v54 = vstv %s43
    %v55 = vadd.f32 %v53, %v54
    %v56 = vstv %s44
    %v57 = vmul.f32 %v55, %v56
    %v58 = vstv %s45
    %v59 = vadd.f32 %v57, %v58
    %v60 = vxor.u32 %v55, 2147483648
    %v61 = vmul.f32 %v60, 1.442695
    %v62 = vpow.pop %v61
    %v63 = vadd.f32 %v62, 1.0
    %v64 = vrcp.pop %v63
    %v65 = vmul.f32 %v63, %v64
    %v66 = vsub.f32 1.0, %v65
    %v67 = vmul.f32 %v64, %v66
    %v68 = vadd.f32 %v64, %v67
    %vm69 = vweird.f32 %v63
    %vm70 = vweird.f32 %v64
    %vm71 = vmor %vm69, %vm70
    %v72 = vsel %vm71, %v64, %v68
    %v73 = vand.u32 2147483647, %v63
    %vm74 = vcmp.eq.f32.partialorder %v73, 8.507059e+37
    %v75 = vand.u32 %v63, 2147483648
    %v76 = vor.u32 1.1754944e-38, %v75
    %v77 = vsel %vm74, %v76, %v72
    %v78 = vmul.f32 1.0, %v77
    %v79 = vxor.u32 %v59, 2147483648
    %v80 = vmul.f32 %v79, 1.442695
    %v81 = vpow.pop %v80
    %v82 = vadd.f32 %v81, 1.0
    %v83 = vrcp.pop %v82
    %v84 = vmul.f32 %v82, %v83
    %v85 = vsub.f32 1.0, %v84
    %v86 = vmul.f32 %v83, %v85
    %v87 = vadd.f32 %v83, %v86
    %vm88 = vweird.f32 %v82
    %vm89 = vweird.f32 %v83
    %vm90 = vmor %vm88, %vm89
    %v91 = vsel %vm90, %v83, %v87
    %v92 = vand.u32 2147483647, %v82
    %vm93 = vcmp.eq.f32.partialorder %v92, 8.507059e+37
    %v94 = vand.u32 %v82, 2147483648
    %v95 = vor.u32 1.1754944e-38, %v94
    %v96 = vsel %vm93, %v95, %v91
    %v97 = vmul.f32 1.0, %v96
    %v98 = vmul.f32 %v78, %v97
    %vm99 = vcmask 7168
    %100 = vst.msk [vmem:[%s3] sm:$0xff] %vm99, %v98
    // Predicated region
    $region22: #{tpu_custom_call.1} parent=1 // pred_check
      _
    $region23: #{tpu_custom_call.1} parent=1 // pred_check_branch
      %102 = sbr.rel (0) target = $region25
    $region24: #{tpu_custom_call.1} parent=1 // pred_region
      _
    $region25: #{tpu_custom_call.1} parent=1 // pred_fallthru
      _
    // Predicated region
    $region26: #{tpu_custom_call.1} parent=1 // pred_check
      _
    $region27: #{tpu_custom_call.1} parent=1 // pred_check_branch
      %104 = sbr.rel (0) target = $region29
    $region28: #{tpu_custom_call.1} parent=1 // pred_region
      _
    $region29: #{tpu_custom_call.1} parent=1 // pred_fallthru
      _
    %105 = vsyncpa [#allocation3], 1
    %106 = vsyncpa [#allocation4], 1

</llo_original>
